<compile_context>
chip_gen: v7x
topology: tpu7x:2x2x1
jax: 0.10.0
libtpu: 0.0.40
codegen_flags: <defaults>
</compile_context>

<pallas_src>
import jax
import jax.numpy as jnp
from jax.experimental import pallas as pl
from jax.experimental.pallas import tpu as pltpu


def _round_up(a: int, b: int) -> int:
    return (a + b - 1) // b * b


def _mlp_kernel(x_ref, wgu_ref, wd_ref, o_ref):
    # x_ref: (tm, Hp)  wgu_ref: (Hp, 2*Ip)  wd_ref: (Ip, Hp)  o_ref: (tm, Hp)
    x = x_ref[...]                       # native dtype (bf16 stays bf16)
    gu = jnp.dot(x, wgu_ref[...], preferred_element_type=jnp.float32)
    ip = gu.shape[-1] // 2               # static; Ip is a multiple of 128
    gate = gu[:, :ip]
    up = gu[:, ip:]
    hidden = (gate * jax.nn.sigmoid(gate)) * up          # SiLU * up, in f32
    out = jnp.dot(hidden.astype(wd_ref.dtype), wd_ref[...],
                  preferred_element_type=jnp.float32)
    o_ref[...] = out.astype(o_ref.dtype)


def asr_adapter_mlp(x, w_gate, w_up, w_down, *, tm=256):
    """Fused gated MLP.

    x:       (B, S, H)
    w_gate:  (H, I)   (transposed vs. nn.Linear storage)
    w_up:    (H, I)
    w_down:  (I, H)
    """
    B, S, H = x.shape
    I = w_gate.shape[1]
    M = B * S

    itemsize = jnp.dtype(x.dtype).itemsize
    sub = 16 if x.dtype == jnp.bfloat16 else 8

    # ---- token tile selection (dtype-aware, >=2 grid steps when possible) ----
    tm = max(sub, _round_up(min(tm, M), sub))
    if _round_up(M, tm) // tm < 2 and M > sub:
        tm_half = _round_up(pl.cdiv(M, 2), sub)
        tm = min(tm, tm_half)
    Mp = _round_up(M, tm)

    # ---- lane-dense padding of H and I ----
    Hp = _round_up(H, 128)
    Ip = _round_up(I, 128)

    x2d = x.reshape(M, H)
    x2d = jnp.pad(x2d, ((0, Mp - M), (0, Hp - H)))
    wg_p = jnp.pad(w_gate, ((0, Hp - H), (0, Ip - I)))
    wu_p = jnp.pad(w_up, ((0, Hp - H), (0, Ip - I)))
    wd_p = jnp.pad(w_down, ((0, Ip - I), (0, Hp - H)))
    # Fused gate|up weight: one (Hp, 2*Ip) matmul per tile.
    wgu = jnp.concatenate([wg_p, wu_p], axis=1)

    grid = (Mp // tm,)

    # ---- VMEM budget (double-buffered) + headroom, capped for v7x (64 MiB) ----
    w_itemsize = jnp.dtype(w_gate.dtype).itemsize
    need = 2 * (tm * Hp * itemsize          # x tile
                + Hp * 2 * Ip * w_itemsize  # fused gate/up weight
                + Ip * Hp * w_itemsize      # down weight
                + tm * Hp * itemsize)       # out tile
    need += tm * 2 * Ip * 4                 # f32 gate/up intermediate
    vmem_limit = int(min(max(need + (8 << 20), 32 << 20), 64 << 20))

    cost = pl.CostEstimate(
        flops=2 * Mp * Hp * 2 * Ip + 2 * Mp * Ip * Hp,
        transcendentals=Mp * Ip,                       # sigmoid exp
        bytes_accessed=(Mp * Hp * itemsize             # x
                        + Hp * 2 * Ip * w_itemsize     # wgu
                        + Ip * Hp * w_itemsize         # wd
                        + Mp * Hp * itemsize))         # out

    out2d = pl.pallas_call(
        _mlp_kernel,
        out_shape=jax.ShapeDtypeStruct((Mp, Hp), x.dtype),
        grid_spec=pltpu.PrefetchScalarGridSpec(
            num_scalar_prefetch=0,
            grid=grid,
            in_specs=[
                pl.BlockSpec((tm, Hp), lambda i: (i, 0)),       # x tile
                pl.BlockSpec((Hp, 2 * Ip), lambda i: (0, 0)),   # fused gate|up
                pl.BlockSpec((Ip, Hp), lambda i: (0, 0)),       # down weight
            ],
            out_specs=pl.BlockSpec((tm, Hp), lambda i: (i, 0)),
        ),
        compiler_params=pltpu.CompilerParams(
            dimension_semantics=("parallel",),
            vmem_limit_bytes=vmem_limit),
        cost_estimate=cost,
    )(x2d, wgu, wd_p)

    # TODO(synk): for LLM-scale (H, I) the full-resident weights should be
    # tiled along I with an f32 accumulator instead of kept fully in VMEM.
    return out2d[:M, :H].reshape(B, S, H)


def _reference(x, w_gate, w_up, w_down):
    g = jnp.einsum("bsh,hi->bsi", x, w_gate)
    u = jnp.einsum("bsh,hi->bsi", x, w_up)
    h = jax.nn.silu(g) * u
    return jnp.einsum("bsi,ih->bsh", h, w_down)


if __name__ == "__main__":
    # Small config consistent with the module:
    #   asr_adapter_hidden_size = 32, asr_adapter_intermediate_size = 64
    B, S, H, I = 2, 8, 32, 64

    key = jax.random.PRNGKey(0)
    kx, kg, ku, kd = jax.random.split(key, 4)

    x = jax.random.normal(kx, (B, S, H), dtype=jnp.float32)
    # Deterministic synthetic weights (stored transposed vs. nn.Linear).
    w_gate = jax.random.normal(kg, (H, I), dtype=jnp.float32) * 0.05
    w_up = jax.random.normal(ku, (H, I), dtype=jnp.float32) * 0.05
    w_down = jax.random.normal(kd, (I, H), dtype=jnp.float32) * 0.05

    out = asr_adapter_mlp(x, w_gate, w_up, w_down)
    out = jax.block_until_ready(out)

    ref = _reference(x, w_gate, w_up, w_down)
    assert out.shape == (B, S, H)
    assert jnp.allclose(out, ref, atol=1e-5, rtol=1e-5), "mismatch vs reference"

    print("KERNEL_OK")
</pallas_src>

<mosaic_0001>
module attributes {stable_mosaic.version = 11 : i64} {
  func.func @_mlp_kernel(%arg0: i32, %arg1: memref<8x128xf32, #tpu.memory_space<vmem>>, %arg2: memref<128x256xf32, #tpu.memory_space<vmem>>, %arg3: memref<128x128xf32, #tpu.memory_space<vmem>>, %arg4: memref<8x128xf32, #tpu.memory_space<vmem>>) attributes {dimension_semantics = [#tpu.dimension_semantics<parallel>], iteration_bounds = array<i64: 2>, scalar_prefetch = 0 : i64, scratch_operands = 0 : i64, tpu.core_type = #tpu.core_type<tc>, window_params = [{transform_indices = @transform_0, window_bounds = array<i64: 8, 128>}, {pipeline_mode = #tpu.pipeline_mode<synchronous>, transform_indices = @transform_1, window_bounds = array<i64: 128, 256>}, {pipeline_mode = #tpu.pipeline_mode<synchronous>, transform_indices = @transform_2, window_bounds = array<i64: 128, 128>}, {transform_indices = @transform_3, window_bounds = array<i64: 8, 128>}]} {
    %c0 = arith.constant 0 : index
    %c0_0 = arith.constant 0 : index
    %0 = vector.load %arg1[%c0, %c0_0] : memref<8x128xf32, #tpu.memory_space<vmem>>, vector<8x128xf32>
    %c0_1 = arith.constant 0 : index
    %c0_2 = arith.constant 0 : index
    %1 = vector.load %arg2[%c0_1, %c0_2] : memref<128x256xf32, #tpu.memory_space<vmem>>, vector<128x256xf32>
    %cst = arith.constant dense<0.000000e+00> : vector<8x256xf32>
    %2 = tpu.matmul %0, %1, %cst {dimension_numbers = #tpu.dot_dimension_numbers<[1], [0], [0], [1], [0, 0, 1, 1], [], []>} : vector<8x128xf32>, vector<128x256xf32>, vector<8x256xf32> -> vector<8x256xf32>
    %3 = vector.extract_strided_slice %2 {offsets = [0, 0], sizes = [8, 128], strides = [1, 1]} : vector<8x256xf32> to vector<8x128xf32>
    %4 = vector.extract_strided_slice %2 {offsets = [0, 128], sizes = [8, 128], strides = [1, 1]} : vector<8x256xf32> to vector<8x128xf32>
    %5 = arith.negf %3 : vector<8x128xf32>
    %6 = math.exp %5 : vector<8x128xf32>
    %cst_3 = arith.constant 1.000000e+00 : f32
    %7 = vector.broadcast %cst_3 : f32 to vector<8x128xf32>
    %8 = arith.addf %7, %6 : vector<8x128xf32>
    %9 = arith.divf %7, %8 : vector<8x128xf32>
    %10 = arith.mulf %3, %9 : vector<8x128xf32>
    %11 = arith.mulf %10, %4 : vector<8x128xf32>
    %c0_4 = arith.constant 0 : index
    %c0_5 = arith.constant 0 : index
    %12 = vector.load %arg3[%c0_4, %c0_5] : memref<128x128xf32, #tpu.memory_space<vmem>>, vector<128x128xf32>
    %cst_6 = arith.constant dense<0.000000e+00> : vector<8x128xf32>
    %13 = tpu.matmul %11, %12, %cst_6 {dimension_numbers = #tpu.dot_dimension_numbers<[1], [0], [0], [1], [0, 0, 1, 1], [], []>} : vector<8x128xf32>, vector<128x128xf32>, vector<8x128xf32> -> vector<8x128xf32>
    %c0_7 = arith.constant 0 : index
    %c0_8 = arith.constant 0 : index
    %14 = vector.load %arg4[%c0_7, %c0_8] : memref<8x128xf32, #tpu.memory_space<vmem>>, vector<8x128xf32>
    tpu.vector_store %arg4[%c0_7, %c0_8], %13 {strides = array<i32>} : memref<8x128xf32, #tpu.memory_space<vmem>>, vector<8x128xf32>,
    return
  }
  func.func @transform_0(%arg0: i32) -> (i32, i32) {
    %c0_i32 = arith.constant 0 : i32
    %c0_i32_0 = arith.constant 0 : i32
    return %arg0, %c0_i32 : i32, i32
  }
  func.func @transform_1(%arg0: i32) -> (i32, i32) {
    %c0_i32 = arith.constant 0 : i32
    %c0_i32_0 = arith.constant 0 : i32
    %c0_i32_1 = arith.constant 0 : i32
    return %c0_i32, %c0_i32_0 : i32, i32
  }
  func.func @transform_2(%arg0: i32) -> (i32, i32) {
    %c0_i32 = arith.constant 0 : i32
    %c0_i32_0 = arith.constant 0 : i32
    %c0_i32_1 = arith.constant 0 : i32
    return %c0_i32, %c0_i32_0 : i32, i32
  }
  func.func @transform_3(%arg0: i32) -> (i32, i32) {
    %c0_i32 = arith.constant 0 : i32
    %c0_i32_0 = arith.constant 0 : i32
    return %arg0, %c0_i32 : i32, i32
  }
}

</mosaic_0001>

<llo_original>
// kernel: tpu_custom_call.1
$region0: #{tpu_custom_call.1}
  #allocation0 [shape = 'u32[]', space=smem, size = 0x4, offset = 0x4, fixed_abs, tag = 'smem constant byte address 0x4 - core index']
  #allocation1 [shape = 'u32[144,128]{1,0:T(1,128)}', space=vmem, size = 0x12000, scoped, tag = 'internal scratch']
  %s0 = inlined_call_operand.hbm [shape: f32[16,128], index: 0, kind: input, shape index: {}]
  %s1 = inlined_call_operand.hbm [shape: f32[128,256], index: 1, kind: input, shape index: {}]
  %s2 = inlined_call_operand.hbm [shape: f32[128,128], index: 2, kind: input, shape index: {}]
  %s3 = inlined_call_operand.hbm [shape: f32[16,128], index: 3, kind: output, shape index: {}]
  %s4 = sld [smem:[#allocation0]]
  $region57: #{tpu_custom_call.1} parent=0
    _
  %s6 = ssub.s32 1, %s4
  %s7 = scalar_select 0, %s6, %s4
  $region1: #{tpu_custom_call.1} parent=0
    #allocation2 [shape = 'u8[8192]{0}', space=vmem, size = 0x2000, scoped, tag = 'input window, operand 0']
    #allocation3 [shape = 's32[2]{0}', space=sflag, size = 0x8, scoped, tag = 'scoped memory for tpu_custom_call.1']
    #allocation4 [shape = 's32[2]{0}', space=sflag, size = 0x8, scoped, tag = 'scoped memory for tpu_custom_call.1']
    #allocation5 [shape = 'u8[131072]{0}', space=vmem, size = 0x20000, scoped, tag = 'input window, operand 1, single buffered']
    #allocation6 [shape = 's32[1]{0}', space=sflag, size = 0x4, scoped, tag = 'scoped memory for tpu_custom_call.1']
    #allocation7 [shape = 'u8[65536]{0}', space=vmem, size = 0x10000, scoped, tag = 'input window, operand 2, single buffered']
    #allocation8 [shape = 'u8[8192]{0}', space=vmem, size = 0x2000, scoped, tag = 'output window, operand 0']
    %8 = vsyncpa [#allocation3], 0
    %s9 = scalar_lea.sflag [#allocation3], 1
    %10 = vsyncpa %s9, 0
    %11 = vsyncpa [#allocation6], 0
    %12 = vsyncpa [#allocation4], 0
    %s13 = scalar_lea.sflag [#allocation4], 1
    %14 = vsyncpa %s13, 0
    loop: start=0, step=1, limit=4
    $region2: #{tpu_custom_call.1} parent=1 // loop_pre_header
      _
    $region3: #{tpu_custom_call.1} parent=1 // loop_header
      %s16 = sphi 0, %s20
      %p17 = scmp.ge.s32.totalorder %s16, 4
      %s26 = sphi 0, %s28
      %s29 = sphi 0, %s26
      %s30 = sphi 0, %s29
      %s46 = sphi 0, %s30
      %s50 = sphi 0, %s50
      %s52 = sphi 0, %s50
      %s53 = sphi 0, %s52
      %s67 = sphi 0, %s53
      %s71 = sphi 0, %s71
      %s73 = sphi 0, %s71
      %s74 = sphi 0, %s73
      %s88 = sphi 0, %s74
      %s94 = sphi 0, %s96
      %s97 = sphi 0, %s94
      %s98 = sphi 0, %s97
      %s114 = sphi 0, %s98
    $region4: #{tpu_custom_call.1} parent=1 // loop_header_branch
      %19 = sbr.rel (%p17) target = $region8
    $region5: #{tpu_custom_call.1} parent=1 // loop_body
      %s21 = ssub.s32 %s16, 1
      %s22 = ssub.s32 %s16, 2
      %s23 = sadd.s32 %s16, 1
      %s24 = ssub.s32 %s16, %s23
      %p25 = scmp.eq.s32.totalorder %s24, 0
      %s27 = sadd.s32 %s26, 1
      %s28 = scalar_select %p25, %s26, %s27
      %p31 = pneg %p25
      %p32 = scmp.eq.s32.totalorder %s16, 1
      %p33 = por %p31, %p32
      %p34 = scmp.ne.s32.totalorder %s26, %s29
      %p35 = scmp.eq.s32.totalorder %s16, 0
      %p36 = por %p34, %p35
      %p37 = scmp.ne.s32.totalorder %s26, %s29
      %p38 = scmp.eq.s32.totalorder %s21, 1
      %p39 = por %p37, %p38
      %p40 = scmp.ne.s32.totalorder %s29, %s30
      %p41 = scmp.eq.s32.totalorder %s21, 0
      %p42 = por %p40, %p41
      %p43 = scmp.ne.s32.totalorder %s29, %s30
      %p44 = scmp.eq.s32.totalorder %s22, 1
      %p45 = por %p43, %p44
      %p47 = scmp.ne.s32.totalorder %s30, %s46
      %p48 = scmp.eq.s32.totalorder %s22, 0
      %p49 = por %p47, %p48
      %s51 = sadd.s32 %s50, 1
      %p54 = scmp.eq.s32.totalorder %s16, 1
      %p55 = scmp.ne.s32.totalorder %s50, %s52
      %p56 = scmp.eq.s32.totalorder %s16, 0
      %p57 = por %p55, %p56
      %p58 = scmp.ne.s32.totalorder %s50, %s52
      %p59 = scmp.eq.s32.totalorder %s21, 1
      %p60 = por %p58, %p59
      %p61 = scmp.ne.s32.totalorder %s52, %s53
      %p62 = scmp.eq.s32.totalorder %s21, 0
      %p63 = por %p61, %p62
      %p64 = scmp.ne.s32.totalorder %s52, %s53
      %p65 = scmp.eq.s32.totalorder %s22, 1
      %p66 = por %p64, %p65
      %p68 = scmp.ne.s32.totalorder %s53, %s67
      %p69 = scmp.eq.s32.totalorder %s22, 0
      %p70 = por %p68, %p69
      %s72 = sadd.s32 %s71, 1
      %p75 = scmp.eq.s32.totalorder %s16, 1
      %p76 = scmp.ne.s32.totalorder %s71, %s73
      %p77 = scmp.eq.s32.totalorder %s16, 0
      %p78 = por %p76, %p77
      %p79 = scmp.ne.s32.totalorder %s71, %s73
      %p80 = scmp.eq.s32.totalorder %s21, 1
      %p81 = por %p79, %p80
      %p82 = scmp.ne.s32.totalorder %s73, %s74
      %p83 = scmp.eq.s32.totalorder %s21, 0
      %p84 = por %p82, %p83
      %p85 = scmp.ne.s32.totalorder %s73, %s74
      %p86 = scmp.eq.s32.totalorder %s22, 1
      %p87 = por %p85, %p86
      %p89 = scmp.ne.s32.totalorder %s74, %s88
      %p90 = scmp.eq.s32.totalorder %s22, 0
      %p91 = por %p89, %p90
      %s92 = ssub.s32 %s16, %s23
      %p93 = scmp.eq.s32.totalorder %s92, 0
      %s95 = sadd.s32 %s94, 1
      %s96 = scalar_select %p93, %s94, %s95
      %p99 = pneg %p93
      %p100 = scmp.eq.s32.totalorder %s16, 1
      %p101 = por %p99, %p100
      %p102 = scmp.ne.s32.totalorder %s94, %s97
      %p103 = scmp.eq.s32.totalorder %s16, 0
      %p104 = por %p102, %p103
      %p105 = scmp.ne.s32.totalorder %s94, %s97
      %p106 = scmp.eq.s32.totalorder %s21, 1
      %p107 = por %p105, %p106
      %p108 = scmp.ne.s32.totalorder %s97, %s98
      %p109 = scmp.eq.s32.totalorder %s21, 0
      %p110 = por %p108, %p109
      %p111 = scmp.ne.s32.totalorder %s97, %s98
      %p112 = scmp.eq.s32.totalorder %s22, 1
      %p113 = por %p111, %p112
      %p115 = scmp.ne.s32.totalorder %s98, %s114
      %p116 = scmp.eq.s32.totalorder %s22, 0
      %p117 = por %p115, %p116
      %p118 = scmp.le.s32.totalorder 1, %s16
      %p119 = scmp.lt.s32.totalorder %s16, 3
      %p120 = pnand %p118, %p119
      %p121 = pneg %p120
      // Predicated region
      $region9: #{tpu_custom_call.1} parent=5 // pred_check
        _
      $region10: #{tpu_custom_call.1} parent=5 // pred_check_branch
        %123 = sbr.rel (%p120) target = $region12
      $region11: #{tpu_custom_call.1} parent=5 // pred_region
        %s124 = ssub.s32 %s16, 1
        // Predicated region
        $region13: #{tpu_custom_call.1} parent=11 // pred_check
          %p125 = pneg %p63
        $region14: #{tpu_custom_call.1} parent=11 // pred_check_branch
          %127 = sbr.rel (%p125) target = $region16
        $region15: #{tpu_custom_call.1} parent=11 // pred_region
          %s129 = ssub.s32 4096, 4096
          %130 = vsyncadd [#allocation6], %s129
          %s131 = sshll.u32 [#allocation5], 4
          %s132 = int_to_ptr.vmem [resolvable:$true] %s131
          %137 = dma.hbm_to_vmem [thread:$0]  %s1, 4096, %s132, [#allocation6], 256, 256, 16
        $region16: #{tpu_custom_call.1} parent=11 // pred_fallthru
          _
        // Predicated region
        $region17: #{tpu_custom_call.1} parent=11 // pred_check
          %p138 = pneg %p84
        $region18: #{tpu_custom_call.1} parent=11 // pred_check_branch
          %140 = sbr.rel (%p138) target = $region20
        $region19: #{tpu_custom_call.1} parent=11 // pred_region
          %s142 = ssub.s32 2048, 2048
          %143 = vsyncadd [#allocation6], %s142
          %s144 = sshll.u32 [#allocation7], 4
          %s145 = int_to_ptr.vmem [resolvable:$true] %s144
          %150 = dma.hbm_to_vmem [thread:$0]  %s2, 2048, %s145, [#allocation6], 128, 128, 8
        $region20: #{tpu_custom_call.1} parent=11 // pred_fallthru
          _
      $region12: #{tpu_custom_call.1} parent=5 // pred_fallthru
        _
      %p151 = scmp.lt.s32.totalorder %s16, 2
      // Predicated region
      $region21: #{tpu_custom_call.1} parent=5 // pred_check
        %p152 = pneg %p151
      $region22: #{tpu_custom_call.1} parent=5 // pred_check_branch
        %154 = sbr.rel (%p152) target = $region24
      $region23: #{tpu_custom_call.1} parent=5 // pred_region
        // Predicated region
        $region25: #{tpu_custom_call.1} parent=23 // pred_check
          %p155 = pneg %p36
        $region26: #{tpu_custom_call.1} parent=23 // pred_check_branch
          %157 = sbr.rel (%p155) target = $region28
        $region27: #{tpu_custom_call.1} parent=23 // pred_region
          %s158 = sand.u32 %s26, 1
          %s159 = scalar_lea.sflag [#allocation3], %s158
          %s160 = sand.u32 %s26, 1
          %s161 = smul.addr %s160, 8
          %s162 = scalar_lea.vmem [#allocation2], %s161
          %s164 = ssub.s32 128, 128
          %165 = vsyncadd %s159, %s164
          %s166 = smul.addr %s16, 128
          %s167 = scalar_lea.hbm %s0, %s166
          %s169 = sshll.u32 %s162, 4
          %s170 = int_to_ptr.vmem [resolvable:$true] %s169
          %172 = dma.hbm_to_vmem [thread:$0]  %s167, 128, %s170, %s159
        $region28: #{tpu_custom_call.1} parent=23 // pred_fallthru
          _
      $region24: #{tpu_custom_call.1} parent=5 // pred_fallthru
        _
      %p173 = scmp.le.s32.totalorder 1, %s16
      %p174 = scmp.lt.s32.totalorder %s16, 3
      %p175 = pnand %p173, %p174
      %p176 = pneg %p175
      // Predicated region
      $region29: #{tpu_custom_call.1} parent=5 // pred_check
        _
      $region30: #{tpu_custom_call.1} parent=5 // pred_check_branch
        %178 = sbr.rel (%p175) target = $region32
      $region31: #{tpu_custom_call.1} parent=5 // pred_region
        %s179 = ssub.s32 %s16, 1
        %s180 = sand.u32 %s29, 1
        %s181 = scalar_lea.sflag [#allocation3], %s180
        %s182 = sand.u32 %s29, 1
        %s183 = smul.addr %s182, 8
        %s184 = scalar_lea.vmem [#allocation2], %s183
        // Predicated region
        $region33: #{tpu_custom_call.1} parent=31 // pred_check
          %p185 = pneg %p42
        $region34: #{tpu_custom_call.1} parent=31 // pred_check_branch
          %187 = sbr.rel (%p185) target = $region36
        $region35: #{tpu_custom_call.1} parent=31 // pred_region
          %188 = dma.done %s181, 128
        $region36: #{tpu_custom_call.1} parent=31 // pred_fallthru
          _
        // Predicated region
        $region37: #{tpu_custom_call.1} parent=31 // pred_check
          %p189 = pneg %p63
        $region38: #{tpu_custom_call.1} parent=31 // pred_check_branch
          %191 = sbr.rel (%p189) target = $region40
        $region39: #{tpu_custom_call.1} parent=31 // pred_region
          %192 = dma.done [#allocation6], 4096
        $region40: #{tpu_custom_call.1} parent=31 // pred_fallthru
          _
        // Predicated region
        $region41: #{tpu_custom_call.1} parent=31 // pred_check
          %p193 = pneg %p84
        $region42: #{tpu_custom_call.1} parent=31 // pred_check_branch
          %195 = sbr.rel (%p193) target = $region44
        $region43: #{tpu_custom_call.1} parent=31 // pred_region
          %196 = dma.done [#allocation6], 2048
        $region44: #{tpu_custom_call.1} parent=31 // pred_fallthru
          _
        %s197 = sand.u32 %s29, 1
        %s198 = scalar_lea.sflag [#allocation3], %s197
        %s199 = sand.u32 %s29, 1
        %s200 = smul.addr %s199, 8
        %s201 = scalar_lea.vmem [#allocation2], %s200
        %p202 = pneg %p42
        %p203 = pneg %p39
        %p204 = pneg %p63
        %p205 = pneg %p60
        %p206 = pneg %p84
        %p207 = pneg %p81
        %p208 = pneg %p110
        %p209 = pneg %p107
        %s210 = sand.u32 %s97, 1
        %s211 = scalar_lea.sflag [#allocation4], %s210
        %s212 = sand.u32 %s97, 1
        %s213 = smul.addr %s212, 8
        %s214 = scalar_lea.vmem [#allocation8], %s213
        %v215 = vld [vmem:[%s184] sm:$0xff]
        %v216 = vld [vmem:[#allocation5] sm:$0xff]
        %v217 = vld [vmem:[#allocation5 + $0x8] sm:$0xff]
        %v218 = vld [vmem:[#allocation5 + $0x10] sm:$0xff]
        %v219 = vld [vmem:[#allocation5 + $0x18] sm:$0xff]
        %v220 = vld [vmem:[#allocation5 + $0x20] sm:$0xff]
        %v221 = vld [vmem:[#allocation5 + $0x28] sm:$0xff]
        %v222 = vld [vmem:[#allocation5 + $0x30] sm:$0xff]
        %v223 = vld [vmem:[#allocation5 + $0x38] sm:$0xff]
        %v224 = vld [vmem:[#allocation5 + $0x40] sm:$0xff]
        %v225 = vld [vmem:[#allocation5 + $0x48] sm:$0xff]
        %v226 = vld [vmem:[#allocation5 + $0x50] sm:$0xff]
        %v227 = vld [vmem:[#allocation5 + $0x58] sm:$0xff]
        %v228 = vld [vmem:[#allocation5 + $0x60] sm:$0xff]
        %v229 = vld [vmem:[#allocation5 + $0x68] sm:$0xff]
        %v230 = vld [vmem:[#allocation5 + $0x70] sm:$0xff]
        %v231 = vld [vmem:[#allocation5 + $0x78] sm:$0xff]
        %v232 = vld [vmem:[#allocation5 + $0x80] sm:$0xff]
        %v233 = vld [vmem:[#allocation5 + $0x88] sm:$0xff]
        %v234 = vld [vmem:[#allocation5 + $0x90] sm:$0xff]
        %v235 = vld [vmem:[#allocation5 + $0x98] sm:$0xff]
        %v236 = vld [vmem:[#allocation5 + $0xa0] sm:$0xff]
        %v237 = vld [vmem:[#allocation5 + $0xa8] sm:$0xff]
        %v238 = vld [vmem:[#allocation5 + $0xb0] sm:$0xff]
        %v239 = vld [vmem:[#allocation5 + $0xb8] sm:$0xff]
        %v240 = vld [vmem:[#allocation5 + $0xc0] sm:$0xff]
        %v241 = vld [vmem:[#allocation5 + $0xc8] sm:$0xff]
        %v242 = vld [vmem:[#allocation5 + $0xd0] sm:$0xff]
        %v243 = vld [vmem:[#allocation5 + $0xd8] sm:$0xff]
        %v244 = vld [vmem:[#allocation5 + $0xe0] sm:$0xff]
        %v245 = vld [vmem:[#allocation5 + $0xe8] sm:$0xff]
        %v246 = vld [vmem:[#allocation5 + $0xf0] sm:$0xff]
        %v247 = vld [vmem:[#allocation5 + $0xf8] sm:$0xff]
        %248 = vmatprep.subr.mxu0 %v217
        %249 = vmatpush1.msra.mxu0 %v216
        %250 = vmatprep.subr.mxu0 %v219
        %251 = vmatpush1.msra.mxu0 %v218
        %252 = vmatprep.subr.mxu0 %v221
        %253 = vmatpush1.msra.mxu0 %v220
        %254 = vmatprep.subr.mxu0 %v223
        %255 = vmatpush1.msra.mxu0 %v222
        %256 = vmatprep.subr.mxu0 %v225
        %257 = vmatpush1.msra.mxu0 %v224
        %258 = vmatprep.subr.mxu0 %v227
        %259 = vmatpush1.msra.mxu0 %v226
        %260 = vmatprep.subr.mxu0 %v229
        %261 = vmatpush1.msra.mxu0 %v228
        %262 = vmatprep.subr.mxu0 %v231
        %263 = vmatpush1.msra.mxu0 %v230
        %264 = vmatprep.subr.mxu0 %v233
        %265 = vmatpush1.msra.mxu0 %v232
        %266 = vmatprep.subr.mxu0 %v235
        %267 = vmatpush1.msra.mxu0 %v234
        %268 = vmatprep.subr.mxu0 %v237
        %269 = vmatpush1.msra.mxu0 %v236
        %270 = vmatprep.subr.mxu0 %v239
        %271 = vmatpush1.msra.mxu0 %v238
        %272 = vmatprep.subr.mxu0 %v241
        %273 = vmatpush1.msra.mxu0 %v240
        %274 = vmatprep.subr.mxu0 %v243
        %275 = vmatpush1.msra.mxu0 %v242
        %276 = vmatprep.subr.mxu0 %v245
        %277 = vmatpush1.msra.mxu0 %v244
        %278 = vmatprep.subr.mxu0 %v247
        %279 = vmatpush1.msra.mxu0 %v246
        %280 = vmatprep.subr.mxu0 0.0
        %281 = vmatpush1.msra.mxu0 0.0
        %282 = vmatprep.subr.mxu0 0.0
        %283 = vmatpush1.msra.mxu0 0.0
        %284 = vmatprep.subr.mxu0 0.0
        %285 = vmatpush1.msra.mxu0 0.0
        %286 = vmatprep.subr.mxu0 0.0
        %287 = vmatpush1.msra.mxu0 0.0
        %288 = vmatprep.subr.mxu0 0.0
        %289 = vmatpush1.msra.mxu0 0.0
        %290 = vmatprep.subr.mxu0 0.0
        %291 = vmatpush1.msra.mxu0 0.0
        %292 = vmatprep.subr.mxu0 0.0
        %293 = vmatpush1.msra.mxu0 0.0
        %294 = vmatprep.subr.mxu0 0.0
        %295 = vmatpush1.msra.mxu0 0.0
        %296 = vmatprep.subr.mxu0 0.0
        %297 = vmatpush1.msra.mxu0 0.0
        %298 = vmatprep.subr.mxu0 0.0
        %299 = vmatpush1.msra.mxu0 0.0
        %300 = vmatprep.subr.mxu0 0.0
        %301 = vmatpush1.msra.mxu0 0.0
        %302 = vmatprep.subr.mxu0 0.0
        %303 = vmatpush1.msra.mxu0 0.0
        %304 = vmatprep.subr.mxu0 0.0
        %305 = vmatpush1.msra.mxu0 0.0
        %306 = vmatprep.subr.mxu0 0.0
        %307 = vmatpush1.msra.mxu0 0.0
        %308 = vmatprep.subr.mxu0 0.0
        %309 = vmatpush1.msra.mxu0 0.0
        %310 = vmatprep.subr.mxu0 0.0
        %311 = vmatpush1.msra.mxu0 0.0
        %312 = vmatprep.mubr.f32.mxu0 0.0
        %313 = vmatmul.mubr.f32.gmra.mrb[0].mxu0 %v215
        %v314 = vpop.f32.mrb[0].mxu0
        %v315 = vadd.f32 0.0, %v314
        %v316 = vpop.f32.mrb[0].mxu0
        %v317 = vadd.f32 0.0, %v316
        %318 = vdwg.mxu0
        %v319 = vxor.u32 %v315, 2147483648
        %v320 = vmul.f32 %v319, 1.442695
        %v321 = vpow.pop %v320
        %v322 = vadd.f32 %v321, 1.0
        %v323 = vrcp.pop %v322
        %v324 = vmul.f32 1.0, %v323
        %v325 = vmul.f32 %v315, %v324
        %v326 = vmul.f32 %v325, %v317
        %v327 = vld [vmem:[#allocation7] sm:$0xff]
        %v328 = vld [vmem:[#allocation7 + $0x8] sm:$0xff]
        %v329 = vld [vmem:[#allocation7 + $0x10] sm:$0xff]
        %v330 = vld [vmem:[#allocation7 + $0x18] sm:$0xff]
        %v331 = vld [vmem:[#allocation7 + $0x20] sm:$0xff]
        %v332 = vld [vmem:[#allocation7 + $0x28] sm:$0xff]
        %v333 = vld [vmem:[#allocation7 + $0x30] sm:$0xff]
        %v334 = vld [vmem:[#allocation7 + $0x38] sm:$0xff]
        %v335 = vld [vmem:[#allocation7 + $0x40] sm:$0xff]
        %v336 = vld [vmem:[#allocation7 + $0x48] sm:$0xff]
        %v337 = vld [vmem:[#allocation7 + $0x50] sm:$0xff]
        %v338 = vld [vmem:[#allocation7 + $0x58] sm:$0xff]
        %v339 = vld [vmem:[#allocation7 + $0x60] sm:$0xff]
        %v340 = vld [vmem:[#allocation7 + $0x68] sm:$0xff]
        %v341 = vld [vmem:[#allocation7 + $0x70] sm:$0xff]
        %v342 = vld [vmem:[#allocation7 + $0x78] sm:$0xff]
        %343 = vmatprep.subr.mxu0 0.0
        %344 = vmatpush1.msra.mxu0 %v327
        %345 = vmatprep.subr.mxu0 0.0
        %346 = vmatpush1.msra.mxu0 %v328
        %347 = vmatprep.subr.mxu0 0.0
        %348 = vmatpush1.msra.mxu0 %v329
        %349 = vmatprep.subr.mxu0 0.0
        %350 = vmatpush1.msra.mxu0 %v330
        %351 = vmatprep.subr.mxu0 0.0
        %352 = vmatpush1.msra.mxu0 %v331
        %353 = vmatprep.subr.mxu0 0.0
        %354 = vmatpush1.msra.mxu0 %v332
        %355 = vmatprep.subr.mxu0 0.0
        %356 = vmatpush1.msra.mxu0 %v333
        %357 = vmatprep.subr.mxu0 0.0
        %358 = vmatpush1.msra.mxu0 %v334
        %359 = vmatprep.subr.mxu0 0.0
        %360 = vmatpush1.msra.mxu0 %v335
        %361 = vmatprep.subr.mxu0 0.0
        %362 = vmatpush1.msra.mxu0 %v336
        %363 = vmatprep.subr.mxu0 0.0
        %364 = vmatpush1.msra.mxu0 %v337
        %365 = vmatprep.subr.mxu0 0.0
        %366 = vmatpush1.msra.mxu0 %v338
        %367 = vmatprep.subr.mxu0 0.0
        %368 = vmatpush1.msra.mxu0 %v339
        %369 = vmatprep.subr.mxu0 0.0
        %370 = vmatpush1.msra.mxu0 %v340
        %371 = vmatprep.subr.mxu0 0.0
        %372 = vmatpush1.msra.mxu0 %v341
        %373 = vmatprep.subr.mxu0 0.0
        %374 = vmatpush1.msra.mxu0 %v342
        %375 = vmatprep.subr.mxu0 0.0
        %376 = vmatpush1.msra.mxu0 0.0
        %377 = vmatprep.subr.mxu0 0.0
        %378 = vmatpush1.msra.mxu0 0.0
        %379 = vmatprep.subr.mxu0 0.0
        %380 = vmatpush1.msra.mxu0 0.0
        %381 = vmatprep.subr.mxu0 0.0
        %382 = vmatpush1.msra.mxu0 0.0
        %383 = vmatprep.subr.mxu0 0.0
        %384 = vmatpush1.msra.mxu0 0.0
        %385 = vmatprep.subr.mxu0 0.0
        %386 = vmatpush1.msra.mxu0 0.0
        %387 = vmatprep.subr.mxu0 0.0
        %388 = vmatpush1.msra.mxu0 0.0
        %389 = vmatprep.subr.mxu0 0.0
        %390 = vmatpush1.msra.mxu0 0.0
        %391 = vmatprep.subr.mxu0 0.0
        %392 = vmatpush1.msra.mxu0 0.0
        %393 = vmatprep.subr.mxu0 0.0
        %394 = vmatpush1.msra.mxu0 0.0
        %395 = vmatprep.subr.mxu0 0.0
        %396 = vmatpush1.msra.mxu0 0.0
        %397 = vmatprep.subr.mxu0 0.0
        %398 = vmatpush1.msra.mxu0 0.0
        %399 = vmatprep.subr.mxu0 0.0
        %400 = vmatpush1.msra.mxu0 0.0
        %401 = vmatprep.subr.mxu0 0.0
        %402 = vmatpush1.msra.mxu0 0.0
        %403 = vmatprep.subr.mxu0 0.0
        %404 = vmatpush1.msra.mxu0 0.0
        %405 = vmatprep.subr.mxu0 0.0
        %406 = vmatpush1.msra.mxu0 0.0
        %407 = vmatprep.mubr.f32.mxu0 0.0
        %408 = vmatmul.mubr.f32.gmra.mrb[0].mxu0 %v326
        %v409 = vpop.f32.mrb[0].mxu0
        %v410 = vadd.f32 0.0, %v409
        %v411 = vpop.f32.mrb[0].mxu0
        %412 = vdwg.mxu0
        %413 = vst [vmem:[%s214] sm:$0xff] %v410
        %s414 = sand.u32 %s97, 1
        %s415 = scalar_lea.sflag [#allocation4], %s414
        %s416 = sand.u32 %s97, 1
        %s417 = smul.addr %s416, 8
        %s418 = scalar_lea.vmem [#allocation8], %s417
        // Predicated region
        $region45: #{tpu_custom_call.1} parent=31 // pred_check
          %p419 = pneg %p107
        $region46: #{tpu_custom_call.1} parent=31 // pred_check_branch
          %421 = sbr.rel (%p419) target = $region48
        $region47: #{tpu_custom_call.1} parent=31 // pred_region
          %s423 = ssub.s32 128, 128
          %424 = vsyncadd %s415, %s423
          %s425 = smul.addr %s21, 128
          %s426 = scalar_lea.hbm %s3, %s425
          %s428 = sshll.u32 %s418, 4
          %s429 = int_to_ptr.vmem [resolvable:$true] %s428
          %431 = dma.vmem_to_hbm [thread:$0]  %s429, 128, %s426, %s415
        $region48: #{tpu_custom_call.1} parent=31 // pred_fallthru
          _
      $region32: #{tpu_custom_call.1} parent=5 // pred_fallthru
        _
      %p432 = scmp.le.s32.totalorder 2, %s16
      // Predicated region
      $region49: #{tpu_custom_call.1} parent=5 // pred_check
        %p433 = pneg %p432
      $region50: #{tpu_custom_call.1} parent=5 // pred_check_branch
        %435 = sbr.rel (%p433) target = $region52
      $region51: #{tpu_custom_call.1} parent=5 // pred_region
        %s436 = ssub.s32 %s16, 2
        // Predicated region
        $region53: #{tpu_custom_call.1} parent=51 // pred_check
          %p437 = pneg %p113
        $region54: #{tpu_custom_call.1} parent=51 // pred_check_branch
          %439 = sbr.rel (%p437) target = $region56
        $region55: #{tpu_custom_call.1} parent=51 // pred_region
          %s440 = sand.u32 %s98, 1
          %s441 = scalar_lea.sflag [#allocation4], %s440
          %s442 = sand.u32 %s98, 1
          %s443 = smul.addr %s442, 8
          %s444 = scalar_lea.vmem [#allocation8], %s443
          %445 = dma.done %s441, 128
        $region56: #{tpu_custom_call.1} parent=51 // pred_fallthru
          _
      $region52: #{tpu_custom_call.1} parent=5 // pred_fallthru
        _
    $region6: #{tpu_custom_call.1} parent=1 // loop_footer
      %s20 = sadd.s32 1, %s16
    $region7: #{tpu_custom_call.1} parent=1 // loop_footer_branch
      %15 = sbr.rel target = $region3
    $region8: #{tpu_custom_call.1} parent=1 // loop_exit
      _
    %446 = vsyncpa [#allocation3], 1
    %s447 = scalar_lea.sflag [#allocation3], 1
    %448 = vsyncpa %s447, 1
    %449 = vsyncpa [#allocation6], 1
    %450 = vsyncpa [#allocation4], 1
    %s451 = scalar_lea.sflag [#allocation4], 1
    %452 = vsyncpa %s451, 1

</llo_original>
